<compile_context>
chip_gen: v5e
topology: v5e:2x2
jax: 0.10.0
libtpu: 0.0.40
codegen_flags: <defaults>
</compile_context>

<pallas_src>
import jax
import jax.numpy as jnp
from jax import lax
from jax.experimental import pallas as pl
from jax.experimental.pallas import tpu as pltpu

NEG_SLOPE = 0.01          # F.leaky_relu default
KERNEL_SIZES = (3, 5, 7, 9, 11)
MAX_K = 11
MAX_PAD = (MAX_K - 1) // 2  # 5


def _build_stack(x, tl):
    # x: (Cin, TL + 2*MAX_PAD) bf16 -> (MAX_K*Cin, TL), tap-major (tap outer, cin inner).
    return jnp.concatenate([x[:, t:t + tl] for t in range(MAX_K)], axis=0)


def _ms_kernel_split(x_ref, w3_ref, w5_ref, w7_ref, w9_ref, w11_ref, b_ref, o_ref):
    # x_ref : (1, 1, Cin, TL + 2*MAX_PAD) bf16
    # wK_ref: (TCo, K*Cin)                bf16, tap-major flattened
    # b_ref : (5, TCo, 1)                 f32
    # o_ref : (1, TCo, TL)                f32
    w_refs = (w3_ref, w5_ref, w7_ref, w9_ref, w11_ref)
    cin = x_ref.shape[2]
    tco, tl = o_ref.shape[1], o_ref.shape[2]

    x_stack = _build_stack(x_ref[0, 0], tl)                       # (11*Cin, TL)
    total = jnp.zeros((tco, tl), jnp.float32)
    for i, k in enumerate(KERNEL_SIZES):
        off = MAX_PAD - (k - 1) // 2                              # static Python int
        y = jnp.dot(w_refs[i][...], x_stack[off * cin:(off + k) * cin, :],
                    preferred_element_type=jnp.float32)           # (TCo, TL) f32 on MXU
        y = y + b_ref[i]                                          # (TCo, 1) broadcast over TL
        total = total + jnp.where(y >= 0, y, NEG_SLOPE * y)
    o_ref[0] = total.astype(o_ref.dtype)


def _ms_kernel_fused(x_ref, wf_ref, b_ref, o_ref):
    # wf_ref: (5*TCo, MAX_K*Cin) bf16 (zero columns for taps a scale does not use) -> one MXU dot.
    tco, tl = o_ref.shape[1], o_ref.shape[2]
    x_stack = _build_stack(x_ref[0, 0], tl)                       # (11*Cin, TL)
    y_all = jnp.dot(wf_ref[...], x_stack, preferred_element_type=jnp.float32)  # (5*TCo, TL)
    total = jnp.zeros((tco, tl), jnp.float32)
    for i in range(len(KERNEL_SIZES)):
        y = y_all[i * tco:(i + 1) * tco, :] + b_ref[i]
        total = total + jnp.where(y >= 0, y, NEG_SLOPE * y)
    o_ref[0] = total.astype(o_ref.dtype)


def _round_up(v, m):
    return ((v + m - 1) // m) * m


def _physical_vmem_bytes():
    try:
        return int(pltpu.get_tpu_info().vmem_capacity_bytes)
    except Exception:
        return 64 << 20            # conservative: v7x per-TensorCore VMEM


def multiscale_conv(x, w_list, b_list):
    """x: (B, C, L) f32. w_list[i]: (C, C, K_i) f32 (PyTorch Conv1d OIW). b_list[i]: (C,) f32.
    Returns (B, C, L) f32 == sum_i leaky_relu(conv1d_i(x))."""
    B, C, L = x.shape

    # ---- tiling ---------------------------------------------------------------
    # L tile: multiple of 256 (lane / MXU-N friendly on all generations).
    TL = _round_up(L, 256) if L <= 1024 else 1024
    # Shrink TL for very wide channel counts so the in-kernel x_stack stays small (v7x 64 MiB).
    while TL > 256 and MAX_K * C * TL * 2 > (16 << 20):
        TL //= 2
    n_l = -(-L // TL)
    Lpad = n_l * TL
    TLh = TL + 2 * MAX_PAD

    # Cout tile: keep the MXU M dim big; pad Cout up rather than dropping to tiny divisors.
    if C <= 256:
        C_pad = _round_up(C, 8)
        TCo = C_pad
    else:
        C_pad = _round_up(C, 256)
        TCo = 256
    n_co = C_pad // TCo

    # Fuse the 5 scale dots into one when the per-scale M dim would badly under-fill the MXU.
    fuse = (n_co == 1 and TCo <= 128)

    # ---- operand prep (bf16 for the MXU, f32 bias) ------------------------------
    # Per-scale weights flattened tap-major: (Cout, Cin, K) -> (Cout, K, Cin) -> (Cout, K*Cin).
    w_flat = []
    for w, K in zip(w_list, KERNEL_SIZES):
        wf = jnp.transpose(w, (0, 2, 1)).reshape(C, K * C)
        w_flat.append(jnp.pad(wf, ((0, C_pad - C), (0, 0))))      # zero-pad Cout
    b_all = jnp.stack([jnp.pad(b, (0, C_pad - C)).reshape(C_pad, 1) for b in b_list],
                      axis=0).astype(jnp.float32)                 # (5, C_pad, 1)

    # Padded + halo'd, per-L-tile windowed input: (B, n_l, C, TL + 2*MAX_PAD) bf16.
    x_p = jnp.pad(x, ((0, 0), (0, 0), (MAX_PAD, MAX_PAD + Lpad - L))).astype(jnp.bfloat16)
    if n_l == 1:
        x_win = x_p[:, None]
    else:
        starts = jnp.arange(n_l) * TL
        x_win = jax.vmap(lambda s: lax.dynamic_slice_in_dim(x_p, s, TLh, axis=2),
                         out_axes=1)(starts)

    x_spec = pl.BlockSpec((1, 1, C, TLh), lambda co, b, l: (b, l, 0, 0))
    b_spec = pl.BlockSpec((len(KERNEL_SIZES), TCo, 1), lambda co, b, l: (0, co, 0))
    out_spec = pl.BlockSpec((1, TCo, TL), lambda co, b, l: (b, co, l))

    if fuse:
        blocks = []
        for wf, K in zip(w_flat, KERNEL_SIZES):
            off = MAX_PAD - (K - 1) // 2
            blocks.append(jnp.pad(wf, ((0, 0), (off * C, (MAX_K - off - K) * C))))
        w_fused = jnp.concatenate(blocks, axis=0).astype(jnp.bfloat16)   # (5*C_pad, 11*C)
        kernel = _ms_kernel_fused
        w_args = (w_fused,)
        w_specs = [pl.BlockSpec((len(KERNEL_SIZES) * TCo, MAX_K * C), lambda co, b, l: (0, 0))]
        w_bytes = int(w_fused.size) * 2
        extra_tmp = len(KERNEL_SIZES) * TCo * TL * 4                     # y_all f32
    else:
        kernel = _ms_kernel_split
        w_args = tuple(w.astype(jnp.bfloat16) for w in w_flat)
        w_specs = [pl.BlockSpec((TCo, K * C), lambda co, b, l: (co, 0)) for K in KERNEL_SIZES]
        w_bytes = sum(TCo * K * C * 2 for K in KERNEL_SIZES)
        extra_tmp = 0

    # ---- VMEM budget (already counts double buffers; capped at physical VMEM) ---
    est = (2 * C * TLh * 2                                # x block (bf16), 2 buffers
           + 2 * TCo * TL * 4                             # out block (f32), 2 buffers
           + 2 * w_bytes                                  # weight block(s), 2 buffers
           + 2 * len(KERNEL_SIZES) * TCo * 128 * 4        # bias block (lane-padded), 2 buffers
           + MAX_K * C * TL * 2                           # x_stack (bf16)
           + 6 * TCo * TL * 4                             # f32 accumulator + live y tiles
           + extra_tmp)
    vmem_limit = min(est + (16 << 20), _physical_vmem_bytes())

    out = pl.pallas_call(
        kernel,
        out_shape=jax.ShapeDtypeStruct((B, C_pad, Lpad), jnp.float32),
        grid_spec=pltpu.PrefetchScalarGridSpec(
            num_scalar_prefetch=0,
            grid=(n_co, B, n_l),                          # weights invariant over inner (B, n_l)
            in_specs=[x_spec] + w_specs + [b_spec],
            out_specs=out_spec,
        ),
        compiler_params=pltpu.CompilerParams(
            dimension_semantics=("parallel", "parallel", "parallel"),
            vmem_limit_bytes=vmem_limit,
        ),
    )(x_win, *w_args, b_all)

    return out[:, :C, :L]


def make_params(key, dim):
    """Deterministic PyTorch-style init: per scale, weight (dim, dim, K_i) and bias (dim,)."""
    w_list, b_list = [], []
    for K in KERNEL_SIZES:
        key, kw, kb = jax.random.split(key, 3)
        bound = 1.0 / jnp.sqrt(dim * K)
        w_list.append(jax.random.uniform(kw, (dim, dim, K), jnp.float32, -bound, bound))
        b_list.append(jax.random.uniform(kb, (dim,), jnp.float32, -bound, bound))
    return w_list, b_list


def reference(x, w_list, b_list):
    """Pure-JAX f32 reference matching the PyTorch forward."""
    out = None
    for w_i, b_i in zip(w_list, b_list):
        K = w_i.shape[-1]
        pad = (K - 1) // 2
        y = lax.conv_general_dilated(
            x, w_i, window_strides=(1,), padding=[(pad, pad)],
            dimension_numbers=("NCH", "OIH", "NCH"))
        y = y + b_i[None, :, None]
        y = jnp.where(y >= 0, y, NEG_SLOPE * y)
        out = y if out is None else out + y
    return out


if __name__ == "__main__":
    B, dim, L = 2, 4, 16
    key = jax.random.PRNGKey(0)
    key, kx = jax.random.split(key)
    x = jax.random.normal(kx, (B, dim, L), jnp.float32)

    w_list, b_list = make_params(key, dim)

    out = multiscale_conv(x, w_list, b_list)
    out = jax.block_until_ready(out)

    ref = reference(x, w_list, b_list)
    assert out.shape == (B, dim, L)
    max_err = jnp.max(jnp.abs(out - ref))
    # bf16 MXU inputs with f32 accumulation -> relaxed tolerance vs. the f32 reference.
    assert jnp.allclose(out, ref, atol=5e-2, rtol=5e-2), f"max err {max_err}"
    print("KERNEL_OK")
</pallas_src>

<mosaic_0001>
module attributes {stable_mosaic.version = 11 : i64} {
  func.func @_ms_kernel_fused(%arg0: i32, %arg1: i32, %arg2: i32, %arg3: memref<1x1x4x266xbf16, #tpu.memory_space<vmem>>, %arg4: memref<40x44xbf16, #tpu.memory_space<vmem>>, %arg5: memref<5x8x1xf32, #tpu.memory_space<vmem>>, %arg6: memref<1x8x256xf32, #tpu.memory_space<vmem>>) attributes {dimension_semantics = [#tpu.dimension_semantics<parallel>, #tpu.dimension_semantics<parallel>, #tpu.dimension_semantics<parallel>], iteration_bounds = array<i64: 1, 2, 1>, scalar_prefetch = 0 : i64, scratch_operands = 0 : i64, tpu.core_type = #tpu.core_type<tc>, window_params = [{transform_indices = @transform_0, window_bounds = array<i64: 1, 1, 4, 266>}, {pipeline_mode = #tpu.pipeline_mode<synchronous>, transform_indices = @transform_1, window_bounds = array<i64: 40, 44>}, {transform_indices = @transform_2, window_bounds = array<i64: 5, 8, 1>}, {transform_indices = @transform_3, window_bounds = array<i64: 1, 8, 256>}]} {
    %c0 = arith.constant 0 : index
    %c0_0 = arith.constant 0 : index
    %c0_1 = arith.constant 0 : index
    %c0_2 = arith.constant 0 : index
    %0 = vector.load %arg3[%c0, %c0_0, %c0_1, %c0_2] : memref<1x1x4x266xbf16, #tpu.memory_space<vmem>>, vector<1x1x4x266xbf16>
    %1 = vector.shape_cast %0 : vector<1x1x4x266xbf16> to vector<4x266xbf16>
    %2 = vector.extract_strided_slice %1 {offsets = [0, 0], sizes = [4, 256], strides = [1, 1]} : vector<4x266xbf16> to vector<4x256xbf16>
    %3 = vector.extract_strided_slice %1 {offsets = [0, 1], sizes = [4, 256], strides = [1, 1]} : vector<4x266xbf16> to vector<4x256xbf16>
    %4 = vector.extract_strided_slice %1 {offsets = [0, 2], sizes = [4, 256], strides = [1, 1]} : vector<4x266xbf16> to vector<4x256xbf16>
    %5 = vector.extract_strided_slice %1 {offsets = [0, 3], sizes = [4, 256], strides = [1, 1]} : vector<4x266xbf16> to vector<4x256xbf16>
    %6 = vector.extract_strided_slice %1 {offsets = [0, 4], sizes = [4, 256], strides = [1, 1]} : vector<4x266xbf16> to vector<4x256xbf16>
    %7 = vector.extract_strided_slice %1 {offsets = [0, 5], sizes = [4, 256], strides = [1, 1]} : vector<4x266xbf16> to vector<4x256xbf16>
    %8 = vector.extract_strided_slice %1 {offsets = [0, 6], sizes = [4, 256], strides = [1, 1]} : vector<4x266xbf16> to vector<4x256xbf16>
    %9 = vector.extract_strided_slice %1 {offsets = [0, 7], sizes = [4, 256], strides = [1, 1]} : vector<4x266xbf16> to vector<4x256xbf16>
    %10 = vector.extract_strided_slice %1 {offsets = [0, 8], sizes = [4, 256], strides = [1, 1]} : vector<4x266xbf16> to vector<4x256xbf16>
    %11 = vector.extract_strided_slice %1 {offsets = [0, 9], sizes = [4, 256], strides = [1, 1]} : vector<4x266xbf16> to vector<4x256xbf16>
    %12 = vector.extract_strided_slice %1 {offsets = [0, 10], sizes = [4, 256], strides = [1, 1]} : vector<4x266xbf16> to vector<4x256xbf16>
    %13 = tpu.concatenate %2, %3, %4, %5, %6, %7, %8, %9, %10, %11, %12 in 0 : vector<4x256xbf16>, vector<4x256xbf16>, vector<4x256xbf16>, vector<4x256xbf16>, vector<4x256xbf16>, vector<4x256xbf16>, vector<4x256xbf16>, vector<4x256xbf16>, vector<4x256xbf16>, vector<4x256xbf16>, vector<4x256xbf16> -> vector<44x256xbf16>
    %c0_3 = arith.constant 0 : index
    %c0_4 = arith.constant 0 : index
    %14 = vector.load %arg4[%c0_3, %c0_4] : memref<40x44xbf16, #tpu.memory_space<vmem>>, vector<40x44xbf16>
    %cst = arith.constant dense<0.000000e+00> : vector<40x256xf32>
    %15 = tpu.matmul %14, %13, %cst {dimension_numbers = #tpu.dot_dimension_numbers<[1], [0], [0], [1], [0, 0, 1, 1], [], []>} : vector<40x44xbf16>, vector<44x256xbf16>, vector<40x256xf32> -> vector<40x256xf32>
    %cst_5 = arith.constant 0.000000e+00 : f32
    %16 = vector.broadcast %cst_5 : f32 to vector<8x256xf32>
    %17 = vector.extract_strided_slice %15 {offsets = [0, 0], sizes = [8, 256], strides = [1, 1]} : vector<40x256xf32> to vector<8x256xf32>
    %c0_6 = arith.constant 0 : index
    %c0_7 = arith.constant 0 : index
    %c0_8 = arith.constant 0 : index
    %18 = vector.load %arg5[%c0_6, %c0_7, %c0_8] : memref<5x8x1xf32, #tpu.memory_space<vmem>>, vector<1x8x1xf32>
    %19 = vector.shape_cast %18 : vector<1x8x1xf32> to vector<8x1xf32>
    %20 = vector.broadcast %19 : vector<8x1xf32> to vector<8x256xf32>
    %21 = arith.addf %17, %20 : vector<8x256xf32>
    %cst_9 = arith.constant 0.000000e+00 : f32
    %22 = vector.broadcast %cst_9 : f32 to vector<8x256xf32>
    %23 = arith.cmpf oge, %21, %22 : vector<8x256xf32>
    %cst_10 = arith.constant 0.00999999977 : f32
    %24 = vector.broadcast %cst_10 : f32 to vector<8x256xf32>
    %25 = arith.mulf %24, %21 : vector<8x256xf32>
    %26 = arith.select %23, %21, %25 : vector<8x256xi1>, vector<8x256xf32>
    %27 = arith.addf %16, %26 : vector<8x256xf32>
    %28 = vector.extract_strided_slice %15 {offsets = [8, 0], sizes = [8, 256], strides = [1, 1]} : vector<40x256xf32> to vector<8x256xf32>
    %c1 = arith.constant 1 : index
    %c0_11 = arith.constant 0 : index
    %c0_12 = arith.constant 0 : index
    %29 = vector.load %arg5[%c1, %c0_11, %c0_12] : memref<5x8x1xf32, #tpu.memory_space<vmem>>, vector<1x8x1xf32>
    %30 = vector.shape_cast %29 : vector<1x8x1xf32> to vector<8x1xf32>
    %31 = vector.broadcast %30 : vector<8x1xf32> to vector<8x256xf32>
    %32 = arith.addf %28, %31 : vector<8x256xf32>
    %cst_13 = arith.constant 0.000000e+00 : f32
    %33 = vector.broadcast %cst_13 : f32 to vector<8x256xf32>
    %34 = arith.cmpf oge, %32, %33 : vector<8x256xf32>
    %cst_14 = arith.constant 0.00999999977 : f32
    %35 = vector.broadcast %cst_14 : f32 to vector<8x256xf32>
    %36 = arith.mulf %35, %32 : vector<8x256xf32>
    %37 = arith.select %34, %32, %36 : vector<8x256xi1>, vector<8x256xf32>
    %38 = arith.addf %27, %37 : vector<8x256xf32>
    %39 = vector.extract_strided_slice %15 {offsets = [16, 0], sizes = [8, 256], strides = [1, 1]} : vector<40x256xf32> to vector<8x256xf32>
    %c2 = arith.constant 2 : index
    %c0_15 = arith.constant 0 : index
    %c0_16 = arith.constant 0 : index
    %40 = vector.load %arg5[%c2, %c0_15, %c0_16] : memref<5x8x1xf32, #tpu.memory_space<vmem>>, vector<1x8x1xf32>
    %41 = vector.shape_cast %40 : vector<1x8x1xf32> to vector<8x1xf32>
    %42 = vector.broadcast %41 : vector<8x1xf32> to vector<8x256xf32>
    %43 = arith.addf %39, %42 : vector<8x256xf32>
    %cst_17 = arith.constant 0.000000e+00 : f32
    %44 = vector.broadcast %cst_17 : f32 to vector<8x256xf32>
    %45 = arith.cmpf oge, %43, %44 : vector<8x256xf32>
    %cst_18 = arith.constant 0.00999999977 : f32
    %46 = vector.broadcast %cst_18 : f32 to vector<8x256xf32>
    %47 = arith.mulf %46, %43 : vector<8x256xf32>
    %48 = arith.select %45, %43, %47 : vector<8x256xi1>, vector<8x256xf32>
    %49 = arith.addf %38, %48 : vector<8x256xf32>
    %50 = vector.extract_strided_slice %15 {offsets = [24, 0], sizes = [8, 256], strides = [1, 1]} : vector<40x256xf32> to vector<8x256xf32>
    %c3 = arith.constant 3 : index
    %c0_19 = arith.constant 0 : index
    %c0_20 = arith.constant 0 : index
    %51 = vector.load %arg5[%c3, %c0_19, %c0_20] : memref<5x8x1xf32, #tpu.memory_space<vmem>>, vector<1x8x1xf32>
    %52 = vector.shape_cast %51 : vector<1x8x1xf32> to vector<8x1xf32>
    %53 = vector.broadcast %52 : vector<8x1xf32> to vector<8x256xf32>
    %54 = arith.addf %50, %53 : vector<8x256xf32>
    %cst_21 = arith.constant 0.000000e+00 : f32
    %55 = vector.broadcast %cst_21 : f32 to vector<8x256xf32>
    %56 = arith.cmpf oge, %54, %55 : vector<8x256xf32>
    %cst_22 = arith.constant 0.00999999977 : f32
    %57 = vector.broadcast %cst_22 : f32 to vector<8x256xf32>
    %58 = arith.mulf %57, %54 : vector<8x256xf32>
    %59 = arith.select %56, %54, %58 : vector<8x256xi1>, vector<8x256xf32>
    %60 = arith.addf %49, %59 : vector<8x256xf32>
    %61 = vector.extract_strided_slice %15 {offsets = [32, 0], sizes = [8, 256], strides = [1, 1]} : vector<40x256xf32> to vector<8x256xf32>
    %c4 = arith.constant 4 : index
    %c0_23 = arith.constant 0 : index
    %c0_24 = arith.constant 0 : index
    %62 = vector.load %arg5[%c4, %c0_23, %c0_24] : memref<5x8x1xf32, #tpu.memory_space<vmem>>, vector<1x8x1xf32>
    %63 = vector.shape_cast %62 : vector<1x8x1xf32> to vector<8x1xf32>
    %64 = vector.broadcast %63 : vector<8x1xf32> to vector<8x256xf32>
    %65 = arith.addf %61, %64 : vector<8x256xf32>
    %cst_25 = arith.constant 0.000000e+00 : f32
    %66 = vector.broadcast %cst_25 : f32 to vector<8x256xf32>
    %67 = arith.cmpf oge, %65, %66 : vector<8x256xf32>
    %cst_26 = arith.constant 0.00999999977 : f32
    %68 = vector.broadcast %cst_26 : f32 to vector<8x256xf32>
    %69 = arith.mulf %68, %65 : vector<8x256xf32>
    %70 = arith.select %67, %65, %69 : vector<8x256xi1>, vector<8x256xf32>
    %71 = arith.addf %60, %70 : vector<8x256xf32>
    %c0_27 = arith.constant 0 : index
    %c0_28 = arith.constant 0 : index
    %c0_29 = arith.constant 0 : index
    %72 = vector.load %arg6[%c0_27, %c0_28, %c0_29] : memref<1x8x256xf32, #tpu.memory_space<vmem>>, vector<1x8x256xf32>
    %73 = vector.shape_cast %72 : vector<1x8x256xf32> to vector<8x256xf32>
    %74 = vector.shape_cast %71 : vector<8x256xf32> to vector<1x8x256xf32>
    tpu.vector_store %arg6[%c0_27, %c0_28, %c0_29], %74 {strides = array<i32>} : memref<1x8x256xf32, #tpu.memory_space<vmem>>, vector<1x8x256xf32>,
    return
  }
  func.func @transform_0(%arg0: i32, %arg1: i32, %arg2: i32) -> (i32, i32, i32, i32) {
    %c0_i32 = arith.constant 0 : i32
    %c0_i32_0 = arith.constant 0 : i32
    %c0_i32_1 = arith.constant 0 : i32
    return %arg1, %arg2, %c0_i32, %c0_i32_0 : i32, i32, i32, i32
  }
  func.func @transform_1(%arg0: i32, %arg1: i32, %arg2: i32) -> (i32, i32) {
    %c0_i32 = arith.constant 0 : i32
    %c0_i32_0 = arith.constant 0 : i32
    %c0_i32_1 = arith.constant 0 : i32
    return %c0_i32, %c0_i32_0 : i32, i32
  }
  func.func @transform_2(%arg0: i32, %arg1: i32, %arg2: i32) -> (i32, i32, i32) {
    %c0_i32 = arith.constant 0 : i32
    %c0_i32_0 = arith.constant 0 : i32
    %c0_i32_1 = arith.constant 0 : i32
    return %c0_i32, %arg0, %c0_i32_0 : i32, i32, i32
  }
  func.func @transform_3(%arg0: i32, %arg1: i32, %arg2: i32) -> (i32, i32, i32) {
    %c0_i32 = arith.constant 0 : i32
    return %arg1, %arg0, %arg2 : i32, i32, i32
  }
}

</mosaic_0001>

<llo_original>
// kernel: tpu_custom_call.1
$region0: #{tpu_custom_call.1}
  #allocation0 [shape = 'u32[]', space=smem, size = 0x4, offset = 0x4, fixed_abs, tag = 'smem constant byte address 0x4 - core index']
  #allocation1 [shape = 'u32[72,128]{1,0:T(1,128)}', space=vmem, size = 0x9000, scoped, tag = 'internal scratch']
  %s0 = inlined_call_operand.vmem [shape: bf16[2,1,4,266], index: 0, kind: input, shape index: {}]
  %s1 = inlined_call_operand.vmem [shape: bf16[40,44], index: 1, kind: input, shape index: {}]
  %s2 = inlined_call_operand.vmem [shape: f32[5,8,1], index: 2, kind: input, shape index: {}]
  %s3 = inlined_call_operand.hbm [shape: f32[2,8,256], index: 3, kind: output, shape index: {}]
  %s4 = sld [smem:[#allocation0]]
  $region45: #{tpu_custom_call.1} parent=0
    _
  %s6 = ssub.s32 1, %s4
  %s7 = scalar_select 0, %s6, %s4
  $region1: #{tpu_custom_call.1} parent=0
    #allocation2 [shape = 'u8[16384]{0}', space=vmem, size = 0x4000, scoped, tag = 'output window, operand 0']
    #allocation3 [shape = 's32[2]{0}', space=sflag, size = 0x8, scoped, tag = 'scoped memory for tpu_custom_call.1']
    %8 = vsyncpa [#allocation3], 0
    %s9 = scalar_lea.sflag [#allocation3], 1
    %10 = vsyncpa %s9, 0
    loop: start=0, step=1, limit=4
    $region2: #{tpu_custom_call.1} parent=1 // loop_pre_header
      _
    $region3: #{tpu_custom_call.1} parent=1 // loop_header
      %s12 = sphi 0, %s16
      %p13 = scmp.ge.s32.totalorder %s12, 4
      %s19 = sphi 0, %s38
      %s20 = sphi 0, %s34
      %s21 = sphi 0, %s30
      %s22 = sphi 0, %s19
      %s23 = sphi 0, %s20
      %s24 = sphi 0, %s21
      %s25 = sphi 0, %s22
      %s26 = sphi 0, %s23
      %s27 = sphi 0, %s24
      %s43 = sphi 0, %s45
      %s46 = sphi 0, %s43
      %s47 = sphi 0, %s46
      %s63 = sphi 0, %s47
      %s67 = sphi 0, %s67
      %s69 = sphi 0, %s67
      %s70 = sphi 0, %s69
      %s84 = sphi 0, %s70
      %s90 = sphi 0, %s92
      %s93 = sphi 0, %s90
      %s94 = sphi 0, %s93
      %s110 = sphi 0, %s94
      %s120 = sphi 0, %s122
      %s123 = sphi 0, %s120
      %s124 = sphi 0, %s123
      %s140 = sphi 0, %s124
    $region4: #{tpu_custom_call.1} parent=1 // loop_header_branch
      %15 = sbr.rel (%p13) target = $region8
    $region5: #{tpu_custom_call.1} parent=1 // loop_body
      %s17 = ssub.s32 %s12, 1
      %s18 = ssub.s32 %s12, 2
      %s28 = sadd.s32 1, %s21
      %p29 = scmp.ge.s32.totalorder %s28, 1
      %s30 = scalar_select %p29, 0, %s28
      %s31 = sadd.s32 1, %s20
      %s32 = scalar_select %p29, %s31, %s20
      %p33 = scmp.ge.s32.totalorder %s32, 2
      %s34 = scalar_select %p33, 0, %s32
      %s35 = sadd.s32 1, %s19
      %s36 = scalar_select %p33, %s35, %s19
      %p37 = scmp.ge.s32.totalorder %s36, 1
      %s38 = scalar_select %p37, 0, %s36
      %s39 = ssub.s32 %s20, %s34
      %s40 = ssub.s32 %s21, %s30
      %s41 = sor.u32 %s39, %s40
      %p42 = scmp.eq.s32.totalorder %s41, 0
      %s44 = sadd.s32 %s43, 1
      %s45 = scalar_select %p42, %s43, %s44
      %p48 = pneg %p42
      %p49 = scmp.eq.s32.totalorder %s12, 1
      %p50 = por %p48, %p49
      %p51 = scmp.ne.s32.totalorder %s43, %s46
      %p52 = scmp.eq.s32.totalorder %s12, 0
      %p53 = por %p51, %p52
      %p54 = scmp.ne.s32.totalorder %s43, %s46
      %p55 = scmp.eq.s32.totalorder %s17, 1
      %p56 = por %p54, %p55
      %p57 = scmp.ne.s32.totalorder %s46, %s47
      %p58 = scmp.eq.s32.totalorder %s17, 0
      %p59 = por %p57, %p58
      %p60 = scmp.ne.s32.totalorder %s46, %s47
      %p61 = scmp.eq.s32.totalorder %s18, 1
      %p62 = por %p60, %p61
      %p64 = scmp.ne.s32.totalorder %s47, %s63
      %p65 = scmp.eq.s32.totalorder %s18, 0
      %p66 = por %p64, %p65
      %s68 = sadd.s32 %s67, 1
      %p71 = scmp.eq.s32.totalorder %s12, 1
      %p72 = scmp.ne.s32.totalorder %s67, %s69
      %p73 = scmp.eq.s32.totalorder %s12, 0
      %p74 = por %p72, %p73
      %p75 = scmp.ne.s32.totalorder %s67, %s69
      %p76 = scmp.eq.s32.totalorder %s17, 1
      %p77 = por %p75, %p76
      %p78 = scmp.ne.s32.totalorder %s69, %s70
      %p79 = scmp.eq.s32.totalorder %s17, 0
      %p80 = por %p78, %p79
      %p81 = scmp.ne.s32.totalorder %s69, %s70
      %p82 = scmp.eq.s32.totalorder %s18, 1
      %p83 = por %p81, %p82
      %p85 = scmp.ne.s32.totalorder %s70, %s84
      %p86 = scmp.eq.s32.totalorder %s18, 0
      %p87 = por %p85, %p86
      %s88 = ssub.s32 %s19, %s38
      %p89 = scmp.eq.s32.totalorder %s88, 0
      %s91 = sadd.s32 %s90, 1
      %s92 = scalar_select %p89, %s90, %s91
      %p95 = pneg %p89
      %p96 = scmp.eq.s32.totalorder %s12, 1
      %p97 = por %p95, %p96
      %p98 = scmp.ne.s32.totalorder %s90, %s93
      %p99 = scmp.eq.s32.totalorder %s12, 0
      %p100 = por %p98, %p99
      %p101 = scmp.ne.s32.totalorder %s90, %s93
      %p102 = scmp.eq.s32.totalorder %s17, 1
      %p103 = por %p101, %p102
      %p104 = scmp.ne.s32.totalorder %s93, %s94
      %p105 = scmp.eq.s32.totalorder %s17, 0
      %p106 = por %p104, %p105
      %p107 = scmp.ne.s32.totalorder %s93, %s94
      %p108 = scmp.eq.s32.totalorder %s18, 1
      %p109 = por %p107, %p108
      %p111 = scmp.ne.s32.totalorder %s94, %s110
      %p112 = scmp.eq.s32.totalorder %s18, 0
      %p113 = por %p111, %p112
      %s114 = ssub.s32 %s20, %s34
      %s115 = ssub.s32 %s19, %s38
      %s116 = sor.u32 %s114, %s115
      %s117 = ssub.s32 %s21, %s30
      %s118 = sor.u32 %s116, %s117
      %p119 = scmp.eq.s32.totalorder %s118, 0
      %s121 = sadd.s32 %s120, 1
      %s122 = scalar_select %p119, %s120, %s121
      %p125 = pneg %p119
      %p126 = scmp.eq.s32.totalorder %s12, 1
      %p127 = por %p125, %p126
      %p128 = scmp.ne.s32.totalorder %s120, %s123
      %p129 = scmp.eq.s32.totalorder %s12, 0
      %p130 = por %p128, %p129
      %p131 = scmp.ne.s32.totalorder %s120, %s123
      %p132 = scmp.eq.s32.totalorder %s17, 1
      %p133 = por %p131, %p132
      %p134 = scmp.ne.s32.totalorder %s123, %s124
      %p135 = scmp.eq.s32.totalorder %s17, 0
      %p136 = por %p134, %p135
      %p137 = scmp.ne.s32.totalorder %s123, %s124
      %p138 = scmp.eq.s32.totalorder %s18, 1
      %p139 = por %p137, %p138
      %p141 = scmp.ne.s32.totalorder %s124, %s140
      %p142 = scmp.eq.s32.totalorder %s18, 0
      %p143 = por %p141, %p142
      %p144 = scmp.le.s32.totalorder 1, %s12
      %p145 = scmp.lt.s32.totalorder %s12, 3
      %p146 = pnand %p144, %p145
      %p147 = pneg %p146
      // Predicated region
      $region9: #{tpu_custom_call.1} parent=5 // pred_check
        _
      $region10: #{tpu_custom_call.1} parent=5 // pred_check_branch
        %149 = sbr.rel (%p146) target = $region12
      $region11: #{tpu_custom_call.1} parent=5 // pred_region
        %s150 = ssub.s32 %s12, 1
        // Predicated region
        $region13: #{tpu_custom_call.1} parent=11 // pred_check
          %p151 = pneg %p80
        $region14: #{tpu_custom_call.1} parent=11 // pred_check_branch
          %153 = sbr.rel (%p151) target = $region16
        $region15: #{tpu_custom_call.1} parent=11 // pred_region
          _
        $region16: #{tpu_custom_call.1} parent=11 // pred_fallthru
          _
        // Predicated region
        $region17: #{tpu_custom_call.1} parent=11 // pred_check
          %p154 = pneg %p106
        $region18: #{tpu_custom_call.1} parent=11 // pred_check_branch
          %156 = sbr.rel (%p154) target = $region20
        $region19: #{tpu_custom_call.1} parent=11 // pred_region
          %p157 = scmp.lt.s32.totalorder %s22, 0
          %s158 = scalar_select %p157, %s22, 0
          %s159 = smul.addr %s158, 8
          %s160 = scalar_lea.vmem %s2, %s159
        $region20: #{tpu_custom_call.1} parent=11 // pred_fallthru
          _
      $region12: #{tpu_custom_call.1} parent=5 // pred_fallthru
        _
      %p161 = scmp.lt.s32.totalorder %s12, 2
      // Predicated region
      $region21: #{tpu_custom_call.1} parent=5 // pred_check
        %p162 = pneg %p161
      $region22: #{tpu_custom_call.1} parent=5 // pred_check_branch
        %164 = sbr.rel (%p162) target = $region24
      $region23: #{tpu_custom_call.1} parent=5 // pred_region
        // Predicated region
        $region25: #{tpu_custom_call.1} parent=23 // pred_check
          %p165 = pneg %p53
        $region26: #{tpu_custom_call.1} parent=23 // pred_check_branch
          %167 = sbr.rel (%p165) target = $region28
        $region27: #{tpu_custom_call.1} parent=23 // pred_region
          %p168 = scmp.lt.s32.totalorder %s20, 1
          %s169 = scalar_select %p168, %s20, 1
          %p170 = scmp.lt.s32.totalorder %s21, 0
          %s171 = scalar_select %p170, %s21, 0
          %s172 = smul.addr %s171, 3
          %s173 = smul.addr %s169, 3
          %s174 = sadd.s32 %s172, %s173
          %s175 = smul.addr %s174, 2
          %s176 = scalar_lea.vmem %s0, %s175
        $region28: #{tpu_custom_call.1} parent=23 // pred_fallthru
          _
      $region24: #{tpu_custom_call.1} parent=5 // pred_fallthru
        _
      %p177 = scmp.le.s32.totalorder 1, %s12
      %p178 = scmp.lt.s32.totalorder %s12, 3
      %p179 = pnand %p177, %p178
      %p180 = pneg %p179
      // Predicated region
      $region29: #{tpu_custom_call.1} parent=5 // pred_check
        _
      $region30: #{tpu_custom_call.1} parent=5 // pred_check_branch
        %182 = sbr.rel (%p179) target = $region32
      $region31: #{tpu_custom_call.1} parent=5 // pred_region
        %s183 = ssub.s32 %s12, 1
        %p184 = scmp.lt.s32.totalorder %s23, 1
        %s185 = scalar_select %p184, %s23, 1
        %p186 = scmp.lt.s32.totalorder %s24, 0
        %s187 = scalar_select %p186, %s24, 0
        %s188 = smul.addr %s187, 3
        %s189 = smul.addr %s185, 3
        %s190 = sadd.s32 %s188, %s189
        %s191 = smul.addr %s190, 2
        %s192 = scalar_lea.vmem %s0, %s191
        %p193 = pneg %p59
        %p194 = pneg %p56
        %p195 = pneg %p80
        %p196 = pneg %p77
        %p197 = scmp.lt.s32.totalorder %s22, 0
        %s198 = scalar_select %p197, %s22, 0
        %s199 = smul.addr %s198, 8
        %s200 = scalar_lea.vmem %s2, %s199
        %p201 = pneg %p106
        %p202 = pneg %p103
        %p203 = pneg %p136
        %p204 = pneg %p133
        %s205 = sand.u32 %s123, 1
        %s206 = scalar_lea.sflag [#allocation3], %s205
        %s207 = sand.u32 %s123, 1
        %s208 = smul.addr %s207, 16
        %s209 = scalar_lea.vmem [#allocation2], %s208
        %p210 = scmp.lt.s32.totalorder %s23, 1
        %s211 = scalar_select %p210, %s23, 1
        %p212 = scmp.lt.s32.totalorder %s24, 0
        %s213 = scalar_select %p212, %s24, 0
        %s214 = smul.addr %s213, 3
        %s215 = smul.addr %s211, 3
        %s216 = sadd.s32 %s214, %s215
        %s217 = smul.addr %s216, 2
        %s218 = scalar_lea.vmem %s0, %s217
        %p219 = scmp.lt.s32.totalorder %s22, 0
        %s220 = scalar_select %p219, %s22, 0
        %s221 = smul.addr %s220, 8
        %s222 = scalar_lea.vmem %s2, %s221
        %s223 = smul.u32 2, %s24
        %v225 = vld [vmem:[%s218] sm:$0x3f]
        %227 = vst [vmem:[#allocation1] ss:$4 sm:$0xff] %v225
        %v228 = vld.sshfl [vmem:[#allocation1] sm:$0xff pattern:$0x73625140]
        %v229 = vld.sshfl [vmem:[#allocation1 + $0x8] sm:$0xff pattern:$0x73625140]
        %s230 = scalar_lea.vmem [#allocation1], 1
        %231 = vst [vmem:[%s230] ss:$4 sm:$0xff] %v225
        %v232 = vld.sshfl [vmem:[#allocation1] sm:$0xff pattern:$0x73625140]
        %v234 = vld.sshfl [vmem:[#allocation1 + $0x8] sm:$0xff pattern:$0x73625140]
        %v236 = vld.sshfl [vmem:[#allocation1 + $0x10] sm:$0xff pattern:$0x73625140]
        %238 = vrot.lane.b32.xlu0 %v232, 127
        %v239 = vpop.permute.xlu0 %238
        %240 = vrot.lane.b32.xlu0 %v234, 127
        %v241 = vpop.permute.xlu0 %240
        %242 = vrot.lane.b32.xlu0 %v236, 127
        %v243 = vpop.permute.xlu0 %242
        %vm244 = vcmask 1039360
        %v245 = vsel %vm244, %v239, %v241
        %v246 = vsel %vm244, %v241, %v243
        %s247 = scalar_lea.vmem [#allocation1], 2
        %248 = vst [vmem:[%s247] ss:$4 sm:$0xff] %v225
        %v249 = vld.sshfl [vmem:[#allocation1] sm:$0xff pattern:$0x73625140]
        %v251 = vld.sshfl [vmem:[#allocation1 + $0x8] sm:$0xff pattern:$0x73625140]
        %v253 = vld.sshfl [vmem:[#allocation1 + $0x10] sm:$0xff pattern:$0x73625140]
        %255 = vrot.lane.b32.xlu0 %v249, 126
        %v256 = vpop.permute.xlu0 %255
        %257 = vrot.lane.b32.xlu0 %v251, 126
        %v258 = vpop.permute.xlu0 %257
        %259 = vrot.lane.b32.xlu0 %v253, 126
        %v260 = vpop.permute.xlu0 %259
        %vm261 = vcmask 1031168
        %v262 = vsel %vm261, %v256, %v258
        %v263 = vsel %vm261, %v258, %v260
        %s264 = scalar_lea.vmem [#allocation1], 3
        %265 = vst [vmem:[%s264] ss:$4 sm:$0xff] %v225
        %v266 = vld.sshfl [vmem:[#allocation1] sm:$0xff pattern:$0x73625140]
        %v268 = vld.sshfl [vmem:[#allocation1 + $0x8] sm:$0xff pattern:$0x73625140]
        %v270 = vld.sshfl [vmem:[#allocation1 + $0x10] sm:$0xff pattern:$0x73625140]
        %272 = vrot.lane.b32.xlu0 %v266, 125
        %v273 = vpop.permute.xlu0 %272
        %274 = vrot.lane.b32.xlu0 %v268, 125
        %v275 = vpop.permute.xlu0 %274
        %276 = vrot.lane.b32.xlu0 %v270, 125
        %v277 = vpop.permute.xlu0 %276
        %vm278 = vcmask 1022976
        %v279 = vsel %vm278, %v273, %v275
        %v280 = vsel %vm278, %v275, %v277
        %281 = vst [vmem:[#allocation1] ss:$4 sm:$0xff] %v225
        %v282 = vld.sshfl [vmem:[#allocation1] sm:$0xff pattern:$0x73625140]
        %v284 = vld.sshfl [vmem:[#allocation1 + $0x8] sm:$0xff pattern:$0x73625140]
        %v286 = vld.sshfl [vmem:[#allocation1 + $0x10] sm:$0xff pattern:$0x73625140]
        %288 = vrot.lane.b32.xlu0 %v282, 124
        %v289 = vpop.permute.xlu0 %288
        %290 = vrot.lane.b32.xlu0 %v284, 124
        %v291 = vpop.permute.xlu0 %290
        %292 = vrot.lane.b32.xlu0 %v286, 124
        %v293 = vpop.permute.xlu0 %292
        %vm294 = vcmask 1014784
        %v295 = vsel %vm294, %v289, %v291
        %v296 = vsel %vm294, %v291, %v293
        %s297 = scalar_lea.vmem [#allocation1], 1
        %298 = vst [vmem:[%s297] ss:$4 sm:$0xff] %v225
        %v299 = vld.sshfl [vmem:[#allocation1] sm:$0xff pattern:$0x73625140]
        %v301 = vld.sshfl [vmem:[#allocation1 + $0x8] sm:$0xff pattern:$0x73625140]
        %v303 = vld.sshfl [vmem:[#allocation1 + $0x10] sm:$0xff pattern:$0x73625140]
        %305 = vrot.lane.b32.xlu0 %v299, 123
        %v306 = vpop.permute.xlu0 %305
        %307 = vrot.lane.b32.xlu0 %v301, 123
        %v308 = vpop.permute.xlu0 %307
        %309 = vrot.lane.b32.xlu0 %v303, 123
        %v310 = vpop.permute.xlu0 %309
        %vm311 = vcmask 1006592
        %v312 = vsel %vm311, %v306, %v308
        %v313 = vsel %vm311, %v308, %v310
        %s314 = scalar_lea.vmem [#allocation1], 2
        %315 = vst [vmem:[%s314] ss:$4 sm:$0xff] %v225
        %v316 = vld.sshfl [vmem:[#allocation1] sm:$0xff pattern:$0x73625140]
        %v318 = vld.sshfl [vmem:[#allocation1 + $0x8] sm:$0xff pattern:$0x73625140]
        %v320 = vld.sshfl [vmem:[#allocation1 + $0x10] sm:$0xff pattern:$0x73625140]
        %322 = vrot.lane.b32.xlu0 %v316, 122
        %v323 = vpop.permute.xlu0 %322
        %324 = vrot.lane.b32.xlu0 %v318, 122
        %v325 = vpop.permute.xlu0 %324
        %326 = vrot.lane.b32.xlu0 %v320, 122
        %v327 = vpop.permute.xlu0 %326
        %vm328 = vcmask 998400
        %v329 = vsel %vm328, %v323, %v325
        %v330 = vsel %vm328, %v325, %v327
        %s331 = scalar_lea.vmem [#allocation1], 3
        %332 = vst [vmem:[%s331] ss:$4 sm:$0xff] %v225
        %v333 = vld.sshfl [vmem:[#allocation1] sm:$0xff pattern:$0x73625140]
        %v335 = vld.sshfl [vmem:[#allocation1 + $0x8] sm:$0xff pattern:$0x73625140]
        %v337 = vld.sshfl [vmem:[#allocation1 + $0x10] sm:$0xff pattern:$0x73625140]
        %339 = vrot.lane.b32.xlu0 %v333, 121
        %v340 = vpop.permute.xlu0 %339
        %341 = vrot.lane.b32.xlu0 %v335, 121
        %v342 = vpop.permute.xlu0 %341
        %343 = vrot.lane.b32.xlu0 %v337, 121
        %v344 = vpop.permute.xlu0 %343
        %vm345 = vcmask 990208
        %v346 = vsel %vm345, %v340, %v342
        %v347 = vsel %vm345, %v342, %v344
        %348 = vst [vmem:[#allocation1] ss:$4 sm:$0xff] %v225
        %v349 = vld.sshfl [vmem:[#allocation1] sm:$0xff pattern:$0x73625140]
        %v351 = vld.sshfl [vmem:[#allocation1 + $0x8] sm:$0xff pattern:$0x73625140]
        %v353 = vld.sshfl [vmem:[#allocation1 + $0x10] sm:$0xff pattern:$0x73625140]
        %355 = vrot.lane.b32.xlu0 %v349, 120
        %v356 = vpop.permute.xlu0 %355
        %357 = vrot.lane.b32.xlu0 %v351, 120
        %v358 = vpop.permute.xlu0 %357
        %359 = vrot.lane.b32.xlu0 %v353, 120
        %v360 = vpop.permute.xlu0 %359
        %vm361 = vcmask 982016
        %v362 = vsel %vm361, %v356, %v358
        %v363 = vsel %vm361, %v358, %v360
        %s364 = scalar_lea.vmem [#allocation1], 1
        %365 = vst [vmem:[%s364] ss:$4 sm:$0xff] %v225
        %v366 = vld.sshfl [vmem:[#allocation1] sm:$0xff pattern:$0x73625140]
        %v368 = vld.sshfl [vmem:[#allocation1 + $0x8] sm:$0xff pattern:$0x73625140]
        %v370 = vld.sshfl [vmem:[#allocation1 + $0x10] sm:$0xff pattern:$0x73625140]
        %372 = vrot.lane.b32.xlu0 %v366, 119
        %v373 = vpop.permute.xlu0 %372
        %374 = vrot.lane.b32.xlu0 %v368, 119
        %v375 = vpop.permute.xlu0 %374
        %376 = vrot.lane.b32.xlu0 %v370, 119
        %v377 = vpop.permute.xlu0 %376
        %vm378 = vcmask 973824
        %v379 = vsel %vm378, %v373, %v375
        %v380 = vsel %vm378, %v375, %v377
        %s381 = scalar_lea.vmem [#allocation1], 2
        %382 = vst [vmem:[%s381] ss:$4 sm:$0xff] %v225
        %v383 = vld.sshfl [vmem:[#allocation1] sm:$0xff pattern:$0x73625140]
        %v385 = vld.sshfl [vmem:[#allocation1 + $0x8] sm:$0xff pattern:$0x73625140]
        %v387 = vld.sshfl [vmem:[#allocation1 + $0x10] sm:$0xff pattern:$0x73625140]
        %389 = vrot.lane.b32.xlu0 %v383, 118
        %v390 = vpop.permute.xlu0 %389
        %391 = vrot.lane.b32.xlu0 %v385, 118
        %v392 = vpop.permute.xlu0 %391
        %393 = vrot.lane.b32.xlu0 %v387, 118
        %v394 = vpop.permute.xlu0 %393
        %vm395 = vcmask 965632
        %v396 = vsel %vm395, %v390, %v392
        %v397 = vsel %vm395, %v392, %v394
        %vm398 = vcmask 1041408
        %v400 = vsel %vm398, %v228, %v245
        %v402 = vsel %vm398, %v229, %v246
        %vm403 = vcmask 1043456
        %v405 = vsel %vm403, %v400, %v262
        %v407 = vsel %vm403, %v402, %v263
        %vm408 = vcmask 1045504
        %v410 = vsel %vm408, %v405, %v279
        %v413 = vsel %vm408, %v407, %v280
        %v417 = vsel %vm398, %v295, %v312
        %v420 = vsel %vm398, %v296, %v313
        %v422 = vsel %vm403, %v417, %v329
        %v424 = vsel %vm403, %v420, %v330
        %v426 = vsel %vm408, %v422, %v346
        %v429 = vsel %vm408, %v424, %v347
        %v433 = vsel %vm398, %v362, %v379
        %v436 = vsel %vm398, %v363, %v380
        %v438 = vsel %vm403, %v433, %v396
        %v440 = vsel %vm403, %v436, %v397
        %v441 = vld [vmem:[%s1] sm:$0xf]
        %v442 = vld [vmem:[%s1 + $0x4] sm:$0xf]
        %v443 = vld [vmem:[%s1 + $0x8] sm:$0xf]
        %v444 = vld [vmem:[%s1 + $0xc] sm:$0xf]
        %v445 = vld [vmem:[%s1 + $0x10] sm:$0xf]
        %v451 = vunpack.c.l.b16 %v441
        %v452 = vunpack.c.l.b16 %v442
        %v453 = vunpack.c.l.b16 %v443
        %v454 = vunpack.c.l.b16 %v444
        %v455 = vunpack.c.l.b16 %v445
        %v456 = vpack.c.b16 %v452, %v451
        %v457 = vpack.c.b16 %v454, %v453
        %v458 = vpack.c.b16 %v455, %v455
        %vm459 = vcmask 359424
        %v461 = vsel %vm459, %v456, 0
        %v464 = vsel %vm459, %v457, 0
        %v467 = vsel %vm459, %v458, 0
        %v469 = vsel %vm408, %v438, 0
        %v471 = vsel %vm408, %v440, 0
        %473 = vmatpush.bf16.msra.mxu0 0
        %474 = vmatpush.bf16.msra.mxu0 0
        %475 = vmatpush.bf16.msra.mxu0 0
        %476 = vmatpush.bf16.msra.mxu0 0
        %477 = vmatpush.bf16.msra.mxu0 0
        %478 = vmatpush.bf16.msra.mxu0 %v469
        %479 = vmatpush.bf16.msra.mxu0 %v426
        %480 = vmatpush.bf16.msra.mxu0 %v410
        %481 = vmatmul.bf16.gmra.mxu0 %v461
        %v482 = vpop.f32.mrf.mxu0
        %v483 = vadd.f32 0.0, %v482
        %v484 = vpop.f32.mrf.mxu0
        %v485 = vadd.f32 0.0, %v484
        %486 = vmatmul.bf16.gmra.mxu0 %v464
        %v487 = vpop.f32.mrf.mxu0
        %v488 = vadd.f32 0.0, %v487
        %v489 = vpop.f32.mrf.mxu0
        %v490 = vadd.f32 0.0, %v489
        %491 = vmatmul.bf16.gmra.mxu0 %v467
        %v492 = vpop.f32.mrf.mxu0
        %v493 = vadd.f32 0.0, %v492
        %v494 = vpop.f32.mrf.mxu0
        %495 = vdwg.mxu0
        %496 = vmatpush.bf16.msra.mxu0 0
        %497 = vmatpush.bf16.msra.mxu0 0
        %498 = vmatpush.bf16.msra.mxu0 0
        %499 = vmatpush.bf16.msra.mxu0 0
        %500 = vmatpush.bf16.msra.mxu0 0
        %501 = vmatpush.bf16.msra.mxu0 %v471
        %502 = vmatpush.bf16.msra.mxu0 %v429
        %503 = vmatpush.bf16.msra.mxu0 %v413
        %504 = vmatmul.bf16.gmra.mxu0 %v461
        %v505 = vpop.f32.mrf.mxu0
        %v506 = vadd.f32 0.0, %v505
        %v507 = vpop.f32.mrf.mxu0
        %v508 = vadd.f32 0.0, %v507
        %509 = vmatmul.bf16.gmra.mxu0 %v464
        %v510 = vpop.f32.mrf.mxu0
        %v511 = vadd.f32 0.0, %v510
        %v512 = vpop.f32.mrf.mxu0
        %v513 = vadd.f32 0.0, %v512
        %514 = vmatmul.bf16.gmra.mxu0 %v467
        %v515 = vpop.f32.mrf.mxu0
        %v516 = vadd.f32 0.0, %v515
        %v517 = vpop.f32.mrf.mxu0
        %518 = vdwg.mxu0
        %v519 = vld [vmem:[%s222] sm:$0xff]
        %521 = vset.pattern.permute.xlu0 0
        %522 = vperm.xlu0 %521, %v519
        %v523 = vpop.permute.xlu0 %522
        %v525 = vadd.f32 %v483, %v523
        %v526 = vadd.f32 %v506, %v523
        %vm527 = vcmp.ge.f32.partialorder %v525, 0.0
        %vm528 = vcmp.ge.f32.partialorder %v526, 0.0
        %v529 = vmul.f32 %v525, 0.01
        %v530 = vmul.f32 %v526, 0.01
        %v531 = vsel %vm527, %v525, %v529
        %v532 = vsel %vm528, %v526, %v530
        %v533 = vadd.f32 %v531, 0.0
        %v534 = vadd.f32 %v532, 0.0
        %s535 = scalar_lea.vmem %s222, 8
        %v536 = vld [vmem:[%s535] sm:$0xff]
        %538 = vset.pattern.permute.xlu0 0
        %539 = vperm.xlu0 %538, %v536
        %v540 = vpop.permute.xlu0 %539
        %v542 = vadd.f32 %v485, %v540
        %v543 = vadd.f32 %v508, %v540
        %vm544 = vcmp.ge.f32.partialorder %v542, 0.0
        %vm545 = vcmp.ge.f32.partialorder %v543, 0.0
        %v546 = vmul.f32 %v542, 0.01
        %v547 = vmul.f32 %v543, 0.01
        %v548 = vsel %vm544, %v542, %v546
        %v549 = vsel %vm545, %v543, %v547
        %v550 = vadd.f32 %v533, %v548
        %v551 = vadd.f32 %v534, %v549
        %s552 = scalar_lea.vmem %s222, 16
        %v553 = vld [vmem:[%s552] sm:$0xff]
        %555 = vset.pattern.permute.xlu0 0
        %556 = vperm.xlu0 %555, %v553
        %v557 = vpop.permute.xlu0 %556
        %v559 = vadd.f32 %v488, %v557
        %v560 = vadd.f32 %v511, %v557
        %vm561 = vcmp.ge.f32.partialorder %v559, 0.0
        %vm562 = vcmp.ge.f32.partialorder %v560, 0.0
        %v563 = vmul.f32 %v559, 0.01
        %v564 = vmul.f32 %v560, 0.01
        %v565 = vsel %vm561, %v559, %v563
        %v566 = vsel %vm562, %v560, %v564
        %v567 = vadd.f32 %v550, %v565
        %v568 = vadd.f32 %v551, %v566
        %s569 = scalar_lea.vmem %s222, 24
        %v570 = vld [vmem:[%s569] sm:$0xff]
        %572 = vset.pattern.permute.xlu0 0
        %573 = vperm.xlu0 %572, %v570
        %v574 = vpop.permute.xlu0 %573
        %v576 = vadd.f32 %v490, %v574
        %v577 = vadd.f32 %v513, %v574
        %vm578 = vcmp.ge.f32.partialorder %v576, 0.0
        %vm579 = vcmp.ge.f32.partialorder %v577, 0.0
        %v580 = vmul.f32 %v576, 0.01
        %v581 = vmul.f32 %v577, 0.01
        %v582 = vsel %vm578, %v576, %v580
        %v583 = vsel %vm579, %v577, %v581
        %v584 = vadd.f32 %v567, %v582
        %v585 = vadd.f32 %v568, %v583
        %s586 = scalar_lea.vmem %s222, 32
        %v587 = vld [vmem:[%s586] sm:$0xff]
        %589 = vset.pattern.permute.xlu0 0
        %590 = vperm.xlu0 %589, %v587
        %v591 = vpop.permute.xlu0 %590
        %v593 = vadd.f32 %v493, %v591
        %v594 = vadd.f32 %v516, %v591
        %vm595 = vcmp.ge.f32.partialorder %v593, 0.0
        %vm596 = vcmp.ge.f32.partialorder %v594, 0.0
        %v597 = vmul.f32 %v593, 0.01
        %v598 = vmul.f32 %v594, 0.01
        %v599 = vsel %vm595, %v593, %v597
        %v600 = vsel %vm596, %v594, %v598
        %v601 = vadd.f32 %v584, %v599
        %v602 = vadd.f32 %v585, %v600
        %603 = vst [vmem:[%s209] sm:$0xff] %v601
        %604 = vst [vmem:[%s209 + $0x8] sm:$0xff] %v602
        %s605 = sand.u32 %s123, 1
        %s606 = scalar_lea.sflag [#allocation3], %s605
        %s607 = sand.u32 %s123, 1
        %s608 = smul.addr %s607, 16
        %s609 = scalar_lea.vmem [#allocation2], %s608
        // Predicated region
        $region33: #{tpu_custom_call.1} parent=31 // pred_check
          %p610 = pneg %p133
        $region34: #{tpu_custom_call.1} parent=31 // pred_check_branch
          %612 = sbr.rel (%p610) target = $region36
        $region35: #{tpu_custom_call.1} parent=31 // pred_region
          %s613 = smul.u32 2, %s24
          %615 = vsyncadd %s606, 0
          %s616 = smul.addr %s22, 2
          %s617 = sadd.s32 %s613, %s616
          %s618 = smul.addr %s23, 2
          %s619 = sadd.s32 %s617, %s618
          %s620 = smul.addr %s619, 8
          %s621 = scalar_lea.hbm %s3, %s620
          %s623 = sshll.u32 %s609, 4
          %s624 = int_to_ptr.vmem [resolvable:$true] %s623
          %s625 = sshll.u32 %s621, 4
          %s626 = int_to_ptr.hbm [resolvable:$true] %s625
          %628 = dma.vmem_to_hbm [thread:$0]  %s624, 256, %s626, %s606
        $region36: #{tpu_custom_call.1} parent=31 // pred_fallthru
          _
      $region32: #{tpu_custom_call.1} parent=5 // pred_fallthru
        _
      %p629 = scmp.le.s32.totalorder 2, %s12
      // Predicated region
      $region37: #{tpu_custom_call.1} parent=5 // pred_check
        %p630 = pneg %p629
      $region38: #{tpu_custom_call.1} parent=5 // pred_check_branch
        %632 = sbr.rel (%p630) target = $region40
      $region39: #{tpu_custom_call.1} parent=5 // pred_region
        %s633 = ssub.s32 %s12, 2
        // Predicated region
        $region41: #{tpu_custom_call.1} parent=39 // pred_check
          %p634 = pneg %p139
        $region42: #{tpu_custom_call.1} parent=39 // pred_check_branch
          %636 = sbr.rel (%p634) target = $region44
        $region43: #{tpu_custom_call.1} parent=39 // pred_region
          %s637 = sand.u32 %s124, 1
          %s638 = scalar_lea.sflag [#allocation3], %s637
          %s639 = sand.u32 %s124, 1
          %s640 = smul.addr %s639, 16
          %s641 = scalar_lea.vmem [#allocation2], %s640
          %643 = dma.done %s638, 256
        $region44: #{tpu_custom_call.1} parent=39 // pred_fallthru
          _
      $region40: #{tpu_custom_call.1} parent=5 // pred_fallthru
        _
    $region6: #{tpu_custom_call.1} parent=1 // loop_footer
      %s16 = sadd.s32 1, %s12
    $region7: #{tpu_custom_call.1} parent=1 // loop_footer_branch
      %11 = sbr.rel target = $region3
    $region8: #{tpu_custom_call.1} parent=1 // loop_exit
      _
    %644 = vsyncpa [#allocation3], 1
    %s645 = scalar_lea.sflag [#allocation3], 1
    %646 = vsyncpa %s645, 1

</llo_original>
